<compile_context>
chip_gen: v7x
topology: tpu7x:2x2x1
jax: 0.10.0
libtpu: 0.0.40
codegen_flags: <defaults>
</compile_context>

<pallas_src>
import functools

import jax
import jax.numpy as jnp
from jax import lax
from jax.experimental import pallas as pl
from jax.experimental.pallas import tpu as pltpu

_LANES = 128      # vreg lane width   (last-dim alignment)
_SUBLANES = 8     # vreg sublane width (second-to-last-dim alignment)


def _cdiv(a, b):
    return -(-a // b)


def _round_up(x, m):
    return _cdiv(x, m) * m


def _pad2d(x, rows, cols):
    pr, pc = rows - x.shape[0], cols - x.shape[1]
    if pr or pc:
        x = jnp.pad(x, ((0, pr), (0, pc)))
    return x


def _vmem_budget_bytes():
    """Generation-aware VMEM budget: ~80% of physical per-core VMEM."""
    try:
        cap = int(pltpu.get_tpu_info().vmem_capacity_bytes)
        if cap <= 0:
            cap = 64 << 20
    except Exception:
        cap = 64 << 20          # conservative default == v7x per-core VMEM
    return int(cap * 0.8)       # ~51 MiB on v7x, ~102 MiB on v5e/v6e


def _to_supported_float(x):
    if (not jnp.issubdtype(x.dtype, jnp.floating)) or x.dtype == jnp.float64:
        return x.astype(jnp.float32)
    return x


def _cka_xla(S, T, eps):
    # TODO(synk): replace with an output-blocked Pallas Gram kernel once the
    #             fused W x W f32 accumulator no longer fits VMEM
    #             (hidden sizes >~1.5k on v7x, ~2k on v5e/v6e).
    S = S.astype(jnp.float32)
    T = T.astype(jnp.float32)
    S = S - jnp.mean(S, axis=0, keepdims=True)
    T = T - jnp.mean(T, axis=0, keepdims=True)
    num = jnp.linalg.norm(S.T @ T)
    den1 = jnp.linalg.norm(S.T @ S) + eps
    den2 = jnp.linalg.norm(T.T @ T) + eps
    return 1.0 - num / jnp.sqrt(den1 * den2)


# ---------------------------------------------------------------------------
# Feature-space path (N >= d): one fused Gram  G += [S|T|e1]^T [S|T|e1]
# ---------------------------------------------------------------------------
def _cka_fused_gram_kernel(s_ref, t_ref, g_ref, *, compute_dtype):
    # grid = (core_split, row_steps); rows are the inner reduction axis.
    @pl.when(pl.program_id(1) == 0)
    def _init():
        g_ref[...] = jnp.zeros_like(g_ref)

    s = s_ref[...].astype(compute_dtype)          # (tile_n, dSp), native dtype
    t = t_ref[...].astype(compute_dtype)          # (tile_n, dTp)
    tile_n = s.shape[0]
    # Ones "column" (lane 0 of a 128-wide block): column sums of S and T fall
    # out of the same MXU pass (row dSp+dTp of the fused Gram).  Padded zero
    # rows of S/T contribute nothing, so no extra row masking is needed.
    ones = (lax.broadcasted_iota(jnp.int32, (tile_n, _LANES), 1) == 0)
    x = jnp.concatenate([s, t, ones.astype(compute_dtype)], axis=1)
    # Contract the streamed row axis directly — no transpose materialized.
    dn = (((0,), (0,)), ((), ()))
    g_ref[...] += lax.dot_general(x, x, dn, preferred_element_type=jnp.float32)


def _cka_feature_path(S, T, n, dSp, dTp, eps, row_tile, budget):
    compute_dtype = jnp.promote_types(S.dtype, T.dtype)
    if compute_dtype == jnp.float64:
        compute_dtype = jnp.float32

    W = dSp + dTp + _LANES                   # fused Gram width (incl. ones blk)
    acc_bytes = 4 * W * W
    num_splits = 2                           # 2 TensorCores on v7x; free elsewhere
    n8 = _round_up(n, _SUBLANES)

    in_bytes_per_row = dSp * S.dtype.itemsize + dTp * T.dtype.itemsize
    avail = budget - 2 * acc_bytes - (2 << 20)   # 2x acc (writeback buffer) + slack
    if avail < 2 * _SUBLANES * in_bytes_per_row:
        return _cka_xla(S, T, eps)           # see TODO(synk) in _cka_xla

    row_cap = 2048 if budget >= (80 << 20) else 1024   # v5e/v6e vs v7x
    max_tile = max(_SUBLANES,
                   (avail // (2 * in_bytes_per_row)) // _SUBLANES * _SUBLANES)
    if row_tile is None:
        row_tile = min(row_cap, max_tile)
    row_tile = max(_SUBLANES, min(int(row_tile), max_tile))

    # Balanced row tiling (no rounding of N up to a multiple of row_tile).
    total_tiles = _round_up(max(num_splits, _cdiv(n8, row_tile)), num_splits)
    tile_n = _round_up(_cdiv(n, total_tiles), _SUBLANES)
    n_pad = total_tiles * tile_n
    steps = total_tiles // num_splits

    Sp = _pad2d(S, n_pad, dSp)               # zero rows/cols provably inert
    Tp = _pad2d(T, n_pad, dTp)

    kernel = functools.partial(_cka_fused_gram_kernel, compute_dtype=compute_dtype)
    flops = 2 * n_pad * W * W
    bytes_accessed = (Sp.size * Sp.dtype.itemsize + Tp.size * Tp.dtype.itemsize
                      + num_splits * acc_bytes)

    g = pl.pallas_call(
        kernel,
        out_shape=jax.ShapeDtypeStruct((num_splits, W, W), jnp.float32),
        grid=(num_splits, steps),
        in_specs=[
            pl.BlockSpec((tile_n, dSp), lambda c, i: (c * steps + i, 0)),
            pl.BlockSpec((tile_n, dTp), lambda c, i: (c * steps + i, 0)),
        ],
        out_specs=pl.BlockSpec((None, W, W), lambda c, i: (c, 0, 0)),
        compiler_params=pltpu.CompilerParams(
            dimension_semantics=("parallel", "arbitrary"),
            vmem_limit_bytes=int(budget),
        ),
        cost_estimate=pl.CostEstimate(
            flops=int(flops), transcendentals=0,
            bytes_accessed=int(bytes_accessed)),
    )(Sp, Tp)

    # O(W^2) epilogue in plain XLA: sum the per-core partials, algebraic
    # centering (G_c = G - N mu mu^T), Frobenius norms.  Everything is on
    # 1/N-scaled Grams with eps/N, so no N^2 rescale (f32-safe) and the final
    # ratio is identical to the reference.
    # TODO(synk): ill-conditioned inputs (means >> centered signal) may want a
    #             two-pass mean-subtract-in-kernel variant instead of the
    #             algebraic correction.
    g = jnp.sum(g, axis=0) * jnp.float32(1.0 / n)
    mu_s = g[dSp + dTp, :dSp]
    mu_t = g[dSp + dTp, dSp:dSp + dTp]
    gss = g[:dSp, :dSp] - jnp.outer(mu_s, mu_s)
    gst = g[:dSp, dSp:dSp + dTp] - jnp.outer(mu_s, mu_t)
    gtt = g[dSp:dSp + dTp, dSp:dSp + dTp] - jnp.outer(mu_t, mu_t)
    eps_n = jnp.float32(eps / n)
    num = jnp.sqrt(jnp.sum(gst * gst))
    den1 = jnp.sqrt(jnp.sum(gss * gss)) + eps_n
    den2 = jnp.sqrt(jnp.sum(gtt * gtt)) + eps_n
    return 1.0 - num / jnp.sqrt(den1 * den2)


# ---------------------------------------------------------------------------
# Sample-space path (N < d): stream feature tiles, accumulate N x N Grams.
#   ||S_c^T T_c||_F^2 = <K_S, K_T>_F with K_S = S_c S_c^T, K_T = T_c T_c^T
# ---------------------------------------------------------------------------
def _cka_sample_kernel(s_ref, t_ref, ks_ref, kt_ref, rs_ref, rt_ref):
    @pl.when(pl.program_id(0) == 0)
    def _init():
        ks_ref[...] = jnp.zeros_like(ks_ref)
        kt_ref[...] = jnp.zeros_like(kt_ref)
        rs_ref[...] = jnp.zeros_like(rs_ref)
        rt_ref[...] = jnp.zeros_like(rt_ref)

    s = s_ref[...]                            # (n_pad, tile_dS), native dtype
    t = t_ref[...]                            # (n_pad, tile_dT)
    dn = (((1,), (1,)), ((), ()))             # contract the feature (lane) axis
    ks_ref[...] += lax.dot_general(s, s, dn, preferred_element_type=jnp.float32)
    kt_ref[...] += lax.dot_general(t, t, dn, preferred_element_type=jnp.float32)

    # Centering terms: blockwise S @ c_S (valid since c splits across feature
    # blocks); ||c||^2 is recovered in the epilogue as sum(rs).
    s32 = s.astype(jnp.float32)
    t32 = t.astype(jnp.float32)
    cs = jnp.sum(s32, axis=0, keepdims=True)
    ct = jnp.sum(t32, axis=0, keepdims=True)
    rs_ref[...] += jnp.sum(s32 * cs, axis=1, keepdims=True)    # (n_pad, 1)
    rt_ref[...] += jnp.sum(t32 * ct, axis=1, keepdims=True)


def _cka_sample_path(S, T, n, dSp, dTp, eps, feat_tile, budget):
    n_pad = _round_up(n, _SUBLANES)
    acc_bytes = 4 * (2 * n_pad * n_pad + 2 * n_pad)
    isS, isT = S.dtype.itemsize, T.dtype.itemsize
    d_max = max(dSp, dTp)

    # Per-tensor balanced feature tiling sharing one tile count; single grid
    # step whenever the padded (N, d) slabs fit the generation's VMEM budget.
    tiles = 1
    if feat_tile is not None:
        tiles = max(tiles, _cdiv(d_max, _round_up(int(feat_tile), _LANES)))

    def _fits(k):
        ts = _round_up(_cdiv(dSp, k), _LANES)
        tt = _round_up(_cdiv(dTp, k), _LANES)
        need = 2 * n_pad * (ts * isS + tt * isT) + 2 * acc_bytes + (2 << 20)
        return need <= budget

    while not _fits(tiles) and tiles < _cdiv(d_max, _LANES):
        tiles += 1

    tile_dS = _round_up(_cdiv(dSp, tiles), _LANES)
    tile_dT = _round_up(_cdiv(dTp, tiles), _LANES)
    Sp = _pad2d(S, n_pad, tiles * tile_dS)
    Tp = _pad2d(T, n_pad, tiles * tile_dT)

    flops = 2 * n_pad * n_pad * (tiles * (tile_dS + tile_dT))
    bytes_accessed = Sp.size * isS + Tp.size * isT + acc_bytes

    ks, kt, rs, rt = pl.pallas_call(
        _cka_sample_kernel,
        out_shape=(
            jax.ShapeDtypeStruct((n_pad, n_pad), jnp.float32),
            jax.ShapeDtypeStruct((n_pad, n_pad), jnp.float32),
            jax.ShapeDtypeStruct((n_pad, 1), jnp.float32),
            jax.ShapeDtypeStruct((n_pad, 1), jnp.float32),
        ),
        grid=(tiles,),
        in_specs=[
            pl.BlockSpec((n_pad, tile_dS), lambda k: (0, k)),
            pl.BlockSpec((n_pad, tile_dT), lambda k: (0, k)),
        ],
        out_specs=(
            pl.BlockSpec((n_pad, n_pad), lambda k: (0, 0)),
            pl.BlockSpec((n_pad, n_pad), lambda k: (0, 0)),
            pl.BlockSpec((n_pad, 1), lambda k: (0, 0)),
            pl.BlockSpec((n_pad, 1), lambda k: (0, 0)),
        ),
        compiler_params=pltpu.CompilerParams(
            dimension_semantics=("arbitrary",),
            vmem_limit_bytes=int(budget),
        ),
        cost_estimate=pl.CostEstimate(
            flops=int(flops), transcendentals=0,
            bytes_accessed=int(bytes_accessed)),
    )(Sp, Tp)

    # O(N^2) XLA epilogue: mask padded rows, rank-1 centering on 1/N-scaled
    # sample Grams (eps scales by 1/N; the final ratio is unchanged).
    inv_n = jnp.float32(1.0 / n)
    m = (jnp.arange(n_pad) < n).astype(jnp.float32)[:, None]
    r_s = rs * inv_n                          # = S @ mu_S (padded rows are 0)
    r_t = rt * inv_n
    mu2_s = jnp.sum(rs) * inv_n * inv_n       # ||mu_S||^2  (sum(rs) = c_S.c_S)
    mu2_t = jnp.sum(rt) * inv_n * inv_n
    mmT = m @ m.T
    a = (ks - r_s @ m.T - m @ r_s.T + mu2_s * mmT) * inv_n
    b = (kt - r_t @ m.T - m @ r_t.T + mu2_t * mmT) * inv_n
    eps_n = jnp.float32(eps / n)
    num = jnp.sqrt(jnp.maximum(jnp.sum(a * b), 0.0))
    den1 = jnp.sqrt(jnp.sum(a * a)) + eps_n
    den2 = jnp.sqrt(jnp.sum(b * b)) + eps_n
    return 1.0 - num / jnp.sqrt(den1 * den2)


# ---------------------------------------------------------------------------
# Public wrapper (matches CKALoss.forward semantics).
# ---------------------------------------------------------------------------
def cka_loss(SH, TH, eps=1e-8, *, row_tile=None, feat_tile=None):
    """1 - ||S_c^T T_c||_F / sqrt((||S_c^T S_c||_F + eps)(||T_c^T T_c||_F + eps))."""
    dS, dT = SH.shape[-1], TH.shape[-1]
    S = _to_supported_float(SH.reshape(-1, dS))
    T = _to_supported_float(TH.reshape(-1, dT))
    n = S.shape[0]
    if T.shape[0] != n:
        raise ValueError("SH and TH must flatten to the same number of rows")

    dSp = _round_up(dS, _LANES)
    dTp = _round_up(dT, _LANES)
    n8 = _round_up(n, _SUBLANES)
    budget = _vmem_budget_bytes()

    # Sample-space (N x N) formulation wins when there are fewer samples than
    # features; feature-space fused-Gram streaming wins (and bounds VMEM)
    # otherwise.
    if n8 < min(dSp, dTp) and n8 <= 1024:
        return _cka_sample_path(S, T, n, dSp, dTp, eps, feat_tile, budget)
    return _cka_feature_path(S, T, n, dSp, dTp, eps, row_tile, budget)


if __name__ == "__main__":
    key = jax.random.PRNGKey(0)
    k1, k2, k3, k4, k5, k6 = jax.random.split(key, 6)

    def ref_cka(SH, TH, eps=1e-8):
        S = SH.reshape(-1, SH.shape[-1]).astype(jnp.float32)
        T = TH.reshape(-1, TH.shape[-1]).astype(jnp.float32)
        S = S - S.mean(0, keepdims=True)
        T = T - T.mean(0, keepdims=True)
        num = jnp.linalg.norm(S.T @ T)
        den1 = jnp.linalg.norm(S.T @ S) + eps
        den2 = jnp.linalg.norm(T.T @ T) + eps
        return 1.0 - num / jnp.sqrt(den1 * den2)

    # Case 1: BART-distillation toy shape (batch=2, seq=8, dS=32, dT=64).
    # N=16 < min(dS,dT) -> sample-space path, single feature step.
    SH1 = jax.random.normal(k1, (2, 8, 32), dtype=jnp.float32)
    TH1 = jax.random.normal(k2, (2, 8, 64), dtype=jnp.float32)
    out1 = jax.block_until_ready(cka_loss(SH1, TH1, eps=1e-8))
    ref1 = ref_cka(SH1, TH1)
    assert jnp.allclose(out1, ref1, rtol=5e-4, atol=5e-4), (out1, ref1)

    # Case 2: native bf16 inputs, non-128-aligned hidden sizes, forced 2-step
    # sample-space feature grid (per-tensor tile widths 128/128).
    SH2 = jax.random.normal(k3, (2, 8, 160), dtype=jnp.bfloat16)
    TH2 = jax.random.normal(k4, (2, 8, 72), dtype=jnp.bfloat16)
    out2 = jax.block_until_ready(cka_loss(SH2, TH2, eps=1e-8, feat_tile=128))
    ref2 = ref_cka(SH2, TH2)
    assert jnp.allclose(out2, ref2, rtol=5e-3, atol=5e-3), (out2, ref2)

    # Case 3: N >> d -> fused-Gram feature path, auto (balanced) row tiling,
    # 2-way core-split grid with a single row step per split (no row padding).
    SH3 = jax.random.normal(k5, (8, 160, 48), dtype=jnp.float32)
    TH3 = jax.random.normal(k6, (8, 160, 40), dtype=jnp.float32)
    out3 = jax.block_until_ready(cka_loss(SH3, TH3, eps=1e-8))
    ref3 = ref_cka(SH3, TH3)
    assert jnp.allclose(out3, ref3, rtol=5e-4, atol=5e-4), (out3, ref3)

    # Case 4: same data, forced multi-step row reduction with a partial tile
    # (balanced tiling: 6 tiles of 216 rows, 16 zero rows of padding total).
    out4 = jax.block_until_ready(cka_loss(SH3, TH3, eps=1e-8, row_tile=256))
    assert jnp.allclose(out4, ref3, rtol=5e-4, atol=5e-4), (out4, ref3)

    print("KERNEL_OK")
</pallas_src>

<mosaic_0001>
module attributes {stable_mosaic.version = 11 : i64} {
  func.func @_cka_sample_kernel(%arg0: i32, %arg1: memref<16x128xf32, #tpu.memory_space<vmem>>, %arg2: memref<16x128xf32, #tpu.memory_space<vmem>>, %arg3: memref<16x16xf32, #tpu.memory_space<vmem>>, %arg4: memref<16x16xf32, #tpu.memory_space<vmem>>, %arg5: memref<16x1xf32, #tpu.memory_space<vmem>>, %arg6: memref<16x1xf32, #tpu.memory_space<vmem>>) attributes {dimension_semantics = [#tpu.dimension_semantics<arbitrary>], iteration_bounds = array<i64: 1>, scalar_prefetch = 0 : i64, scratch_operands = 0 : i64, tpu.core_type = #tpu.core_type<tc>, window_params = [{transform_indices = @transform_0, window_bounds = array<i64: 16, 128>}, {transform_indices = @transform_1, window_bounds = array<i64: 16, 128>}, {pipeline_mode = #tpu.pipeline_mode<synchronous>, transform_indices = @transform_2, window_bounds = array<i64: 16, 16>}, {pipeline_mode = #tpu.pipeline_mode<synchronous>, transform_indices = @transform_3, window_bounds = array<i64: 16, 16>}, {pipeline_mode = #tpu.pipeline_mode<synchronous>, transform_indices = @transform_4, window_bounds = array<i64: 16, 1>}, {pipeline_mode = #tpu.pipeline_mode<synchronous>, transform_indices = @transform_5, window_bounds = array<i64: 16, 1>}]} {
    %c0_i32 = arith.constant 0 : i32
    %0 = arith.cmpi eq, %arg0, %c0_i32 : i32
    %1 = arith.extui %0 : i1 to i32
    %c0_i32_0 = arith.constant 0 : i32
    %2 = arith.cmpi ne, %1, %c0_i32_0 : i32
    scf.if %2 {
      %cst_25 = arith.constant 0.000000e+00 : f32
      %31 = vector.broadcast %cst_25 : f32 to vector<16x16xf32>
      %c0_26 = arith.constant 0 : index
      %c0_27 = arith.constant 0 : index
      %32 = vector.load %arg3[%c0_26, %c0_27] : memref<16x16xf32, #tpu.memory_space<vmem>>, vector<16x16xf32>
      tpu.vector_store %arg3[%c0_26, %c0_27], %31 {strides = array<i32>} : memref<16x16xf32, #tpu.memory_space<vmem>>, vector<16x16xf32>,
      %cst_28 = arith.constant 0.000000e+00 : f32
      %33 = vector.broadcast %cst_28 : f32 to vector<16x16xf32>
      %c0_29 = arith.constant 0 : index
      %c0_30 = arith.constant 0 : index
      %34 = vector.load %arg4[%c0_29, %c0_30] : memref<16x16xf32, #tpu.memory_space<vmem>>, vector<16x16xf32>
      tpu.vector_store %arg4[%c0_29, %c0_30], %33 {strides = array<i32>} : memref<16x16xf32, #tpu.memory_space<vmem>>, vector<16x16xf32>,
      %cst_31 = arith.constant 0.000000e+00 : f32
      %35 = vector.broadcast %cst_31 : f32 to vector<16x1xf32>
      %c0_32 = arith.constant 0 : index
      %c0_33 = arith.constant 0 : index
      %36 = vector.load %arg5[%c0_32, %c0_33] : memref<16x1xf32, #tpu.memory_space<vmem>>, vector<16x1xf32>
      tpu.vector_store %arg5[%c0_32, %c0_33], %35 {strides = array<i32>} : memref<16x1xf32, #tpu.memory_space<vmem>>, vector<16x1xf32>,
      %cst_34 = arith.constant 0.000000e+00 : f32
      %37 = vector.broadcast %cst_34 : f32 to vector<16x1xf32>
      %c0_35 = arith.constant 0 : index
      %c0_36 = arith.constant 0 : index
      %38 = vector.load %arg6[%c0_35, %c0_36] : memref<16x1xf32, #tpu.memory_space<vmem>>, vector<16x1xf32>
      tpu.vector_store %arg6[%c0_35, %c0_36], %37 {strides = array<i32>} : memref<16x1xf32, #tpu.memory_space<vmem>>, vector<16x1xf32>,
    } else {
    }
    %c0 = arith.constant 0 : index
    %c0_1 = arith.constant 0 : index
    %3 = vector.load %arg1[%c0, %c0_1] : memref<16x128xf32, #tpu.memory_space<vmem>>, vector<16x128xf32>
    %c0_2 = arith.constant 0 : index
    %c0_3 = arith.constant 0 : index
    %4 = vector.load %arg2[%c0_2, %c0_3] : memref<16x128xf32, #tpu.memory_space<vmem>>, vector<16x128xf32>
    %c0_4 = arith.constant 0 : index
    %c0_5 = arith.constant 0 : index
    %5 = vector.load %arg3[%c0_4, %c0_5] : memref<16x16xf32, #tpu.memory_space<vmem>>, vector<16x16xf32>
    %cst = arith.constant dense<0.000000e+00> : vector<16x16xf32>
    %6 = tpu.matmul %3, %3, %cst {dimension_numbers = #tpu.dot_dimension_numbers<[1], [1], [0], [0], [0, 0, 1, 0], [], []>} : vector<16x128xf32>, vector<16x128xf32>, vector<16x16xf32> -> vector<16x16xf32>
    %7 = arith.addf %5, %6 : vector<16x16xf32>
    %c0_6 = arith.constant 0 : index
    %c0_7 = arith.constant 0 : index
    %8 = vector.load %arg3[%c0_6, %c0_7] : memref<16x16xf32, #tpu.memory_space<vmem>>, vector<16x16xf32>
    tpu.vector_store %arg3[%c0_6, %c0_7], %7 {strides = array<i32>} : memref<16x16xf32, #tpu.memory_space<vmem>>, vector<16x16xf32>,
    %c0_8 = arith.constant 0 : index
    %c0_9 = arith.constant 0 : index
    %9 = vector.load %arg4[%c0_8, %c0_9] : memref<16x16xf32, #tpu.memory_space<vmem>>, vector<16x16xf32>
    %cst_10 = arith.constant dense<0.000000e+00> : vector<16x16xf32>
    %10 = tpu.matmul %4, %4, %cst_10 {dimension_numbers = #tpu.dot_dimension_numbers<[1], [1], [0], [0], [0, 0, 1, 0], [], []>} : vector<16x128xf32>, vector<16x128xf32>, vector<16x16xf32> -> vector<16x16xf32>
    %11 = arith.addf %9, %10 : vector<16x16xf32>
    %c0_11 = arith.constant 0 : index
    %c0_12 = arith.constant 0 : index
    %12 = vector.load %arg4[%c0_11, %c0_12] : memref<16x16xf32, #tpu.memory_space<vmem>>, vector<16x16xf32>
    tpu.vector_store %arg4[%c0_11, %c0_12], %11 {strides = array<i32>} : memref<16x16xf32, #tpu.memory_space<vmem>>, vector<16x16xf32>,
    %cst_13 = arith.constant dense<0.000000e+00> : vector<128xf32>
    %13 = vector.multi_reduction <add>, %3, %cst_13 [0] : vector<16x128xf32> to vector<128xf32>
    %14 = vector.shape_cast %13 : vector<128xf32> to vector<1x128xf32>
    %cst_14 = arith.constant dense<0.000000e+00> : vector<128xf32>
    %15 = vector.multi_reduction <add>, %4, %cst_14 [0] : vector<16x128xf32> to vector<128xf32>
    %16 = vector.shape_cast %15 : vector<128xf32> to vector<1x128xf32>
    %c0_15 = arith.constant 0 : index
    %c0_16 = arith.constant 0 : index
    %17 = vector.load %arg5[%c0_15, %c0_16] : memref<16x1xf32, #tpu.memory_space<vmem>>, vector<16x1xf32>
    %18 = vector.broadcast %14 : vector<1x128xf32> to vector<16x128xf32>
    %19 = arith.mulf %3, %18 : vector<16x128xf32>
    %cst_17 = arith.constant dense<0.000000e+00> : vector<16xf32>
    %20 = vector.multi_reduction <add>, %19, %cst_17 [1] : vector<16x128xf32> to vector<16xf32>
    %21 = vector.shape_cast %20 : vector<16xf32> to vector<16x1xf32>
    %22 = arith.addf %17, %21 : vector<16x1xf32>
    %c0_18 = arith.constant 0 : index
    %c0_19 = arith.constant 0 : index
    %23 = vector.load %arg5[%c0_18, %c0_19] : memref<16x1xf32, #tpu.memory_space<vmem>>, vector<16x1xf32>
    tpu.vector_store %arg5[%c0_18, %c0_19], %22 {strides = array<i32>} : memref<16x1xf32, #tpu.memory_space<vmem>>, vector<16x1xf32>,
    %c0_20 = arith.constant 0 : index
    %c0_21 = arith.constant 0 : index
    %24 = vector.load %arg6[%c0_20, %c0_21] : memref<16x1xf32, #tpu.memory_space<vmem>>, vector<16x1xf32>
    %25 = vector.broadcast %16 : vector<1x128xf32> to vector<16x128xf32>
    %26 = arith.mulf %4, %25 : vector<16x128xf32>
    %cst_22 = arith.constant dense<0.000000e+00> : vector<16xf32>
    %27 = vector.multi_reduction <add>, %26, %cst_22 [1] : vector<16x128xf32> to vector<16xf32>
    %28 = vector.shape_cast %27 : vector<16xf32> to vector<16x1xf32>
    %29 = arith.addf %24, %28 : vector<16x1xf32>
    %c0_23 = arith.constant 0 : index
    %c0_24 = arith.constant 0 : index
    %30 = vector.load %arg6[%c0_23, %c0_24] : memref<16x1xf32, #tpu.memory_space<vmem>>, vector<16x1xf32>
    tpu.vector_store %arg6[%c0_23, %c0_24], %29 {strides = array<i32>} : memref<16x1xf32, #tpu.memory_space<vmem>>, vector<16x1xf32>,
    return
  }
  func.func @transform_0(%arg0: i32) -> (i32, i32) {
    %c0_i32 = arith.constant 0 : i32
    %c0_i32_0 = arith.constant 0 : i32
    return %c0_i32, %arg0 : i32, i32
  }
  func.func @transform_1(%arg0: i32) -> (i32, i32) {
    %c0_i32 = arith.constant 0 : i32
    %c0_i32_0 = arith.constant 0 : i32
    return %c0_i32, %arg0 : i32, i32
  }
  func.func @transform_2(%arg0: i32) -> (i32, i32) {
    %c0_i32 = arith.constant 0 : i32
    %c0_i32_0 = arith.constant 0 : i32
    %c0_i32_1 = arith.constant 0 : i32
    return %c0_i32, %c0_i32_0 : i32, i32
  }
  func.func @transform_3(%arg0: i32) -> (i32, i32) {
    %c0_i32 = arith.constant 0 : i32
    %c0_i32_0 = arith.constant 0 : i32
    %c0_i32_1 = arith.constant 0 : i32
    return %c0_i32, %c0_i32_0 : i32, i32
  }
  func.func @transform_4(%arg0: i32) -> (i32, i32) {
    %c0_i32 = arith.constant 0 : i32
    %c0_i32_0 = arith.constant 0 : i32
    %c0_i32_1 = arith.constant 0 : i32
    return %c0_i32, %c0_i32_0 : i32, i32
  }
  func.func @transform_5(%arg0: i32) -> (i32, i32) {
    %c0_i32 = arith.constant 0 : i32
    %c0_i32_0 = arith.constant 0 : i32
    %c0_i32_1 = arith.constant 0 : i32
    return %c0_i32, %c0_i32_0 : i32, i32
  }
}

</mosaic_0001>

<llo_original>
// kernel: tpu_custom_call.1
$region0: #{tpu_custom_call.1}
  #allocation0 [shape = 'u32[]', space=smem, size = 0x4, offset = 0x4, fixed_abs, tag = 'smem constant byte address 0x4 - core index']
  #allocation1 [shape = 'u32[144,128]{1,0:T(1,128)}', space=vmem, size = 0x12000, scoped, tag = 'internal scratch']
  %s0 = inlined_call_operand.hbm [shape: f32[16,128], index: 0, kind: input, shape index: {}]
  %s1 = inlined_call_operand.hbm [shape: f32[16,128], index: 1, kind: input, shape index: {}]
  %s2 = inlined_call_operand.hbm [shape: f32[16,16], index: 2, kind: output, shape index: {0}]
  %s3 = inlined_call_operand.hbm [shape: f32[16,16], index: 3, kind: output, shape index: {1}]
  %s4 = inlined_call_operand.vmem [shape: f32[16,1], index: 4, kind: output, shape index: {2}]
  %s5 = inlined_call_operand.vmem [shape: f32[16,1], index: 5, kind: output, shape index: {3}]
  %6 = xla_tuple %s2, %s3, %s4, %s5
  %s7 = sld [smem:[#allocation0]]
  $region54: #{tpu_custom_call.1} parent=0
    _
  %s9 = ssub.s32 1, %s7
  %s10 = scalar_select 0, %s9, %s7
  $region1: #{tpu_custom_call.1} parent=0
    #allocation2 [shape = 'u8[8192]{0}', space=vmem, size = 0x2000, scoped, tag = 'input window, operand 0, single buffered']
    #allocation3 [shape = 's32[1]{0}', space=sflag, size = 0x4, scoped, tag = 'scoped memory for tpu_custom_call.1']
    #allocation4 [shape = 's32[1]{0}', space=sflag, size = 0x4, scoped, tag = 'scoped memory for tpu_custom_call.1']
    #allocation5 [shape = 'u8[8192]{0}', space=vmem, size = 0x2000, scoped, tag = 'input window, operand 1, single buffered']
    #allocation6 [shape = 's32[1]{0}', space=sflag, size = 0x4, scoped, tag = 'scoped memory for tpu_custom_call.1']
    #allocation7 [shape = 'u8[8192]{0}', space=vmem, size = 0x2000, scoped, tag = 'output window, operand 0, single buffered']
    #allocation8 [shape = 'u8[8192]{0}', space=vmem, size = 0x2000, scoped, tag = 'output window, operand 1, single buffered']
    #allocation9 [shape = 's32[1]{0}', space=sflag, size = 0x4, scoped, tag = 'scoped memory for tpu_custom_call.1']
    %11 = vsyncpa [#allocation3], 0
    %12 = vsyncpa [#allocation6], 0
    %13 = vsyncpa [#allocation4], 0
    %14 = vsyncpa [#allocation9], 0
    // Predicated region
    $region2: #{tpu_custom_call.1} parent=1 // pred_check
      _
    $region3: #{tpu_custom_call.1} parent=1 // pred_check_branch
      %16 = sbr.rel (0) target = $region5
    $region4: #{tpu_custom_call.1} parent=1 // pred_region
      %s18 = ssub.s32 256, 256
      %19 = vsyncadd [#allocation3], %s18
      %s20 = sshll.u32 [#allocation2], 4
      %s21 = int_to_ptr.vmem [resolvable:$true] %s20
      %26 = dma.hbm_to_vmem [thread:$0]  %s0, 256, %s21, [#allocation3], 128, 128, 8
    $region5: #{tpu_custom_call.1} parent=1 // pred_fallthru
      _
    // Predicated region
    $region6: #{tpu_custom_call.1} parent=1 // pred_check
      _
    $region7: #{tpu_custom_call.1} parent=1 // pred_check_branch
      %28 = sbr.rel (0) target = $region9
    $region8: #{tpu_custom_call.1} parent=1 // pred_region
      %s30 = ssub.s32 256, 256
      %31 = vsyncadd [#allocation6], %s30
      %s32 = sshll.u32 [#allocation5], 4
      %s33 = int_to_ptr.vmem [resolvable:$true] %s32
      %38 = dma.hbm_to_vmem [thread:$0]  %s1, 256, %s33, [#allocation6], 128, 128, 8
    $region9: #{tpu_custom_call.1} parent=1 // pred_fallthru
      _
    // Predicated region
    $region10: #{tpu_custom_call.1} parent=1 // pred_check
      _
    $region11: #{tpu_custom_call.1} parent=1 // pred_check_branch
      %40 = sbr.rel (0) target = $region13
    $region12: #{tpu_custom_call.1} parent=1 // pred_region
      %41 = dma.done [#allocation3], 256
    $region13: #{tpu_custom_call.1} parent=1 // pred_fallthru
      _
    // Predicated region
    $region14: #{tpu_custom_call.1} parent=1 // pred_check
      _
    $region15: #{tpu_custom_call.1} parent=1 // pred_check_branch
      %43 = sbr.rel (0) target = $region17
    $region16: #{tpu_custom_call.1} parent=1 // pred_region
      %44 = dma.done [#allocation6], 256
    $region17: #{tpu_custom_call.1} parent=1 // pred_fallthru
      _
    %p45 = scmp.eq.s32.totalorder 0, 0
    // Predicated region
    $region18: #{tpu_custom_call.1} parent=1 // pred_check
      %p46 = pneg %p45
    $region19: #{tpu_custom_call.1} parent=1 // pred_check_branch
      %48 = sbr.rel (%p46) target = $region21
    $region20: #{tpu_custom_call.1} parent=1 // pred_region
      %vm49 = vcmask 130048
      %50 = vst.msk [vmem:[#allocation7] sm:$0xff] %vm49, 0.0
      %51 = vst.msk [vmem:[#allocation7 + $0x8] sm:$0xff] %vm49, 0.0
      %52 = vst.msk [vmem:[#allocation8] sm:$0xff] %vm49, 0.0
      %53 = vst.msk [vmem:[#allocation8 + $0x8] sm:$0xff] %vm49, 0.0
      %vm54 = vcmask 7168
      %55 = vst.msk [vmem:[%s4] sm:$0xff] %vm54, 0.0
      %56 = vst.msk [vmem:[%s4 + $0x8] sm:$0xff] %vm54, 0.0
      %57 = vst.msk [vmem:[%s5] sm:$0xff] %vm54, 0.0
      %58 = vst.msk [vmem:[%s5 + $0x8] sm:$0xff] %vm54, 0.0
    $region21: #{tpu_custom_call.1} parent=1 // pred_fallthru
      _
    %v59 = vld [vmem:[#allocation2] sm:$0xff]
    %v60 = vld [vmem:[#allocation2 + $0x8] sm:$0xff]
    %v61 = vld [vmem:[#allocation5] sm:$0xff]
    %v62 = vld [vmem:[#allocation5 + $0x8] sm:$0xff]
    %v63 = vld [vmem:[#allocation7] sm:$0xff]
    %v64 = vld [vmem:[#allocation7 + $0x8] sm:$0xff]
    %65 = vmatprep.subr.mxu0 0.0
    %66 = vmatpush1.xpose.msra.mxu0 %v59
    %67 = vmatprep.subr.mxu0 0.0
    %68 = vmatpush1.xpose.msra.mxu0 %v60
    %69 = vmatprep.subr.mxu0 0.0
    %70 = vmatpush1.xpose.msra.mxu0 0.0
    %71 = vmatprep.subr.mxu0 0.0
    %72 = vmatpush1.xpose.msra.mxu0 0.0
    %73 = vmatprep.subr.mxu0 0.0
    %74 = vmatpush1.xpose.msra.mxu0 0.0
    %75 = vmatprep.subr.mxu0 0.0
    %76 = vmatpush1.xpose.msra.mxu0 0.0
    %77 = vmatprep.subr.mxu0 0.0
    %78 = vmatpush1.xpose.msra.mxu0 0.0
    %79 = vmatprep.subr.mxu0 0.0
    %80 = vmatpush1.xpose.msra.mxu0 0.0
    %81 = vmatprep.subr.mxu0 0.0
    %82 = vmatpush1.xpose.msra.mxu0 0.0
    %83 = vmatprep.subr.mxu0 0.0
    %84 = vmatpush1.xpose.msra.mxu0 0.0
    %85 = vmatprep.subr.mxu0 0.0
    %86 = vmatpush1.xpose.msra.mxu0 0.0
    %87 = vmatprep.subr.mxu0 0.0
    %88 = vmatpush1.xpose.msra.mxu0 0.0
    %89 = vmatprep.subr.mxu0 0.0
    %90 = vmatpush1.xpose.msra.mxu0 0.0
    %91 = vmatprep.subr.mxu0 0.0
    %92 = vmatpush1.xpose.msra.mxu0 0.0
    %93 = vmatprep.subr.mxu0 0.0
    %94 = vmatpush1.xpose.msra.mxu0 0.0
    %95 = vmatprep.subr.mxu0 0.0
    %96 = vmatpush1.xpose.msra.mxu0 0.0
    %97 = vmatprep.subr.mxu0 0.0
    %98 = vmatpush1.xpose.msra.mxu0 0.0
    %99 = vmatprep.subr.mxu0 0.0
    %100 = vmatpush1.xpose.msra.mxu0 0.0
    %101 = vmatprep.subr.mxu0 0.0
    %102 = vmatpush1.xpose.msra.mxu0 0.0
    %103 = vmatprep.subr.mxu0 0.0
    %104 = vmatpush1.xpose.msra.mxu0 0.0
    %105 = vmatprep.subr.mxu0 0.0
    %106 = vmatpush1.xpose.msra.mxu0 0.0
    %107 = vmatprep.subr.mxu0 0.0
    %108 = vmatpush1.xpose.msra.mxu0 0.0
    %109 = vmatprep.subr.mxu0 0.0
    %110 = vmatpush1.xpose.msra.mxu0 0.0
    %111 = vmatprep.subr.mxu0 0.0
    %112 = vmatpush1.xpose.msra.mxu0 0.0
    %113 = vmatprep.subr.mxu0 0.0
    %114 = vmatpush1.xpose.msra.mxu0 0.0
    %115 = vmatprep.subr.mxu0 0.0
    %116 = vmatpush1.xpose.msra.mxu0 0.0
    %117 = vmatprep.subr.mxu0 0.0
    %118 = vmatpush1.xpose.msra.mxu0 0.0
    %119 = vmatprep.subr.mxu0 0.0
    %120 = vmatpush1.xpose.msra.mxu0 0.0
    %121 = vmatprep.subr.mxu0 0.0
    %122 = vmatpush1.xpose.msra.mxu0 0.0
    %123 = vmatprep.subr.mxu0 0.0
    %124 = vmatpush1.xpose.msra.mxu0 0.0
    %125 = vmatprep.subr.mxu0 0.0
    %126 = vmatpush1.xpose.msra.mxu0 0.0
    %127 = vmatprep.subr.mxu0 0.0
    %128 = vmatpush1.xpose.msra.mxu0 0.0
    %129 = vmatprep.mubr.f32.mxu0 0.0
    %130 = vmatmul.mubr.f32.gmra.mrb[0].mxu0 %v59
    %v131 = vpop.f32.mrb[0].mxu0
    %v132 = vadd.f32 0.0, %v131
    %v133 = vpop.f32.mrb[0].mxu0
    %134 = vmatprep.mubr.f32.mxu0 0.0
    %135 = vmatmul.mubr.f32.gmra.mrb[0].mxu0 %v60
    %v136 = vpop.f32.mrb[0].mxu0
    %v137 = vadd.f32 0.0, %v136
    %v138 = vpop.f32.mrb[0].mxu0
    %139 = vdwg.mxu0
    %v140 = vadd.f32 %v63, %v132
    %v141 = vadd.f32 %v64, %v137
    %vm142 = vcmask 130048
    %143 = vst.msk [vmem:[#allocation7] sm:$0xff] %vm142, %v140
    %144 = vst.msk [vmem:[#allocation7 + $0x8] sm:$0xff] %vm142, %v141
    %v145 = vld [vmem:[#allocation8] sm:$0xff]
    %v146 = vld [vmem:[#allocation8 + $0x8] sm:$0xff]
    %147 = vmatprep.subr.mxu0 0.0
    %148 = vmatpush1.xpose.msra.mxu0 %v61
    %149 = vmatprep.subr.mxu0 0.0
    %150 = vmatpush1.xpose.msra.mxu0 %v62
    %151 = vmatprep.subr.mxu0 0.0
    %152 = vmatpush1.xpose.msra.mxu0 0.0
    %153 = vmatprep.subr.mxu0 0.0
    %154 = vmatpush1.xpose.msra.mxu0 0.0
    %155 = vmatprep.subr.mxu0 0.0
    %156 = vmatpush1.xpose.msra.mxu0 0.0
    %157 = vmatprep.subr.mxu0 0.0
    %158 = vmatpush1.xpose.msra.mxu0 0.0
    %159 = vmatprep.subr.mxu0 0.0
    %160 = vmatpush1.xpose.msra.mxu0 0.0
    %161 = vmatprep.subr.mxu0 0.0
    %162 = vmatpush1.xpose.msra.mxu0 0.0
    %163 = vmatprep.subr.mxu0 0.0
    %164 = vmatpush1.xpose.msra.mxu0 0.0
    %165 = vmatprep.subr.mxu0 0.0
    %166 = vmatpush1.xpose.msra.mxu0 0.0
    %167 = vmatprep.subr.mxu0 0.0
    %168 = vmatpush1.xpose.msra.mxu0 0.0
    %169 = vmatprep.subr.mxu0 0.0
    %170 = vmatpush1.xpose.msra.mxu0 0.0
    %171 = vmatprep.subr.mxu0 0.0
    %172 = vmatpush1.xpose.msra.mxu0 0.0
    %173 = vmatprep.subr.mxu0 0.0
    %174 = vmatpush1.xpose.msra.mxu0 0.0
    %175 = vmatprep.subr.mxu0 0.0
    %176 = vmatpush1.xpose.msra.mxu0 0.0
    %177 = vmatprep.subr.mxu0 0.0
    %178 = vmatpush1.xpose.msra.mxu0 0.0
    %179 = vmatprep.subr.mxu0 0.0
    %180 = vmatpush1.xpose.msra.mxu0 0.0
    %181 = vmatprep.subr.mxu0 0.0
    %182 = vmatpush1.xpose.msra.mxu0 0.0
    %183 = vmatprep.subr.mxu0 0.0
    %184 = vmatpush1.xpose.msra.mxu0 0.0
    %185 = vmatprep.subr.mxu0 0.0
    %186 = vmatpush1.xpose.msra.mxu0 0.0
    %187 = vmatprep.subr.mxu0 0.0
    %188 = vmatpush1.xpose.msra.mxu0 0.0
    %189 = vmatprep.subr.mxu0 0.0
    %190 = vmatpush1.xpose.msra.mxu0 0.0
    %191 = vmatprep.subr.mxu0 0.0
    %192 = vmatpush1.xpose.msra.mxu0 0.0
    %193 = vmatprep.subr.mxu0 0.0
    %194 = vmatpush1.xpose.msra.mxu0 0.0
    %195 = vmatprep.subr.mxu0 0.0
    %196 = vmatpush1.xpose.msra.mxu0 0.0
    %197 = vmatprep.subr.mxu0 0.0
    %198 = vmatpush1.xpose.msra.mxu0 0.0
    %199 = vmatprep.subr.mxu0 0.0
    %200 = vmatpush1.xpose.msra.mxu0 0.0
    %201 = vmatprep.subr.mxu0 0.0
    %202 = vmatpush1.xpose.msra.mxu0 0.0
    %203 = vmatprep.subr.mxu0 0.0
    %204 = vmatpush1.xpose.msra.mxu0 0.0
    %205 = vmatprep.subr.mxu0 0.0
    %206 = vmatpush1.xpose.msra.mxu0 0.0
    %207 = vmatprep.subr.mxu0 0.0
    %208 = vmatpush1.xpose.msra.mxu0 0.0
    %209 = vmatprep.subr.mxu0 0.0
    %210 = vmatpush1.xpose.msra.mxu0 0.0
    %211 = vmatprep.mubr.f32.mxu0 0.0
    %212 = vmatmul.mubr.f32.gmra.mrb[0].mxu0 %v61
    %v213 = vpop.f32.mrb[0].mxu0
    %v214 = vadd.f32 0.0, %v213
    %v215 = vpop.f32.mrb[0].mxu0
    %216 = vmatprep.mubr.f32.mxu0 0.0
    %217 = vmatmul.mubr.f32.gmra.mrb[0].mxu0 %v62
    %v218 = vpop.f32.mrb[0].mxu0
    %v219 = vadd.f32 0.0, %v218
    %v220 = vpop.f32.mrb[0].mxu0
    %221 = vdwg.mxu0
    %v222 = vadd.f32 %v145, %v214
    %v223 = vadd.f32 %v146, %v219
    %224 = vst.msk [vmem:[#allocation8] sm:$0xff] %vm142, %v222
    %225 = vst.msk [vmem:[#allocation8 + $0x8] sm:$0xff] %vm142, %v223
    %v226 = vadd.f32 %v59, %v60
    %v227 = vrot.slane %v226, 4
    %v228 = vadd.f32 %v226, %v227
    %v229 = vrot.slane %v228, 2
    %v230 = vadd.f32 %v228, %v229
    %v231 = vrot.slane %v230, 1
    %v232 = vadd.f32 %v230, %v231
    %v233 = vadd.f32 %v61, %v62
    %v234 = vrot.slane %v233, 4
    %v235 = vadd.f32 %v233, %v234
    %v236 = vrot.slane %v235, 2
    %v237 = vadd.f32 %v235, %v236
    %v238 = vrot.slane %v237, 1
    %v239 = vadd.f32 %v237, %v238
    %v240 = vld [vmem:[%s4] sm:$0xff]
    %v241 = vld [vmem:[%s4 + $0x8] sm:$0xff]
    %v242 = vmul.f32 %v59, %v232
    %v243 = vmul.f32 %v60, %v232
    %244 = vadd.xlane.f32.xlu0 %v242
    %v245 = vpop.xlane.xlu0 %244
    %246 = vadd.xlane.f32.xlu0 %v243
    %v247 = vpop.xlane.xlu0 %246
    %v248 = vadd.f32 %v240, %v245
    %v249 = vadd.f32 %v241, %v247
    %vm250 = vcmask 7168
    %251 = vst.msk [vmem:[%s4] sm:$0xff] %vm250, %v248
    %252 = vst.msk [vmem:[%s4 + $0x8] sm:$0xff] %vm250, %v249
    %v253 = vld [vmem:[%s5] sm:$0xff]
    %v254 = vld [vmem:[%s5 + $0x8] sm:$0xff]
    %v255 = vmul.f32 %v61, %v239
    %v256 = vmul.f32 %v62, %v239
    %257 = vadd.xlane.f32.xlu0 %v255
    %v258 = vpop.xlane.xlu0 %257
    %259 = vadd.xlane.f32.xlu0 %v256
    %v260 = vpop.xlane.xlu0 %259
    %v261 = vadd.f32 %v253, %v258
    %v262 = vadd.f32 %v254, %v260
    %263 = vst.msk [vmem:[%s5] sm:$0xff] %vm250, %v261
    %264 = vst.msk [vmem:[%s5 + $0x8] sm:$0xff] %vm250, %v262
    // Predicated region
    $region22: #{tpu_custom_call.1} parent=1 // pred_check
      _
    $region23: #{tpu_custom_call.1} parent=1 // pred_check_branch
      %266 = sbr.rel (0) target = $region25
    $region24: #{tpu_custom_call.1} parent=1 // pred_region
      %s268 = ssub.s32 256, 256
      %269 = vsyncadd [#allocation4], %s268
      %s270 = sshll.u32 [#allocation7], 4
      %s271 = int_to_ptr.vmem [resolvable:$true] %s270
      %276 = dma.vmem_to_hbm [thread:$0]  %s271, 256, %s2, [#allocation4], 128, 128, 8
    $region25: #{tpu_custom_call.1} parent=1 // pred_fallthru
      _
    // Predicated region
    $region26: #{tpu_custom_call.1} parent=1 // pred_check
      _
    $region27: #{tpu_custom_call.1} parent=1 // pred_check_branch
      %278 = sbr.rel (0) target = $region29
    $region28: #{tpu_custom_call.1} parent=1 // pred_region
      %s280 = ssub.s32 256, 256
      %281 = vsyncadd [#allocation9], %s280
      %s282 = sshll.u32 [#allocation8], 4
      %s283 = int_to_ptr.vmem [resolvable:$true] %s282
      %288 = dma.vmem_to_hbm [thread:$0]  %s283, 256, %s3, [#allocation9], 128, 128, 8
    $region29: #{tpu_custom_call.1} parent=1 // pred_fallthru
      _
    // Predicated region
    $region30: #{tpu_custom_call.1} parent=1 // pred_check
      _
    $region31: #{tpu_custom_call.1} parent=1 // pred_check_branch
      %290 = sbr.rel (0) target = $region33
    $region32: #{tpu_custom_call.1} parent=1 // pred_region
      _
    $region33: #{tpu_custom_call.1} parent=1 // pred_fallthru
      _
    // Predicated region
    $region34: #{tpu_custom_call.1} parent=1 // pred_check
      _
    $region35: #{tpu_custom_call.1} parent=1 // pred_check_branch
      %292 = sbr.rel (0) target = $region37
    $region36: #{tpu_custom_call.1} parent=1 // pred_region
      _
    $region37: #{tpu_custom_call.1} parent=1 // pred_fallthru
      _
    // Predicated region
    $region38: #{tpu_custom_call.1} parent=1 // pred_check
      _
    $region39: #{tpu_custom_call.1} parent=1 // pred_check_branch
      %294 = sbr.rel (0) target = $region41
    $region40: #{tpu_custom_call.1} parent=1 // pred_region
      %295 = dma.done [#allocation4], 256
    $region41: #{tpu_custom_call.1} parent=1 // pred_fallthru
      _
    // Predicated region
    $region42: #{tpu_custom_call.1} parent=1 // pred_check
      _
    $region43: #{tpu_custom_call.1} parent=1 // pred_check_branch
      %297 = sbr.rel (0) target = $region45
    $region44: #{tpu_custom_call.1} parent=1 // pred_region
      %298 = dma.done [#allocation9], 256
    $region45: #{tpu_custom_call.1} parent=1 // pred_fallthru
      _
    // Predicated region
    $region46: #{tpu_custom_call.1} parent=1 // pred_check
      _
    $region47: #{tpu_custom_call.1} parent=1 // pred_check_branch
      %300 = sbr.rel (0) target = $region49
    $region48: #{tpu_custom_call.1} parent=1 // pred_region
      _
    $region49: #{tpu_custom_call.1} parent=1 // pred_fallthru
      _
    // Predicated region
    $region50: #{tpu_custom_call.1} parent=1 // pred_check
      _
    $region51: #{tpu_custom_call.1} parent=1 // pred_check_branch
      %302 = sbr.rel (0) target = $region53
    $region52: #{tpu_custom_call.1} parent=1 // pred_region
      _
    $region53: #{tpu_custom_call.1} parent=1 // pred_fallthru
      _
    %303 = vsyncpa [#allocation3], 1
    %304 = vsyncpa [#allocation6], 1
    %305 = vsyncpa [#allocation4], 1
    %306 = vsyncpa [#allocation9], 1

</llo_original>
